<compile_context>
chip_gen: v7x
topology: tpu7x:2x2x1
jax: 0.10.0
libtpu: 0.0.40
codegen_flags: <defaults>
</compile_context>

<pallas_src>
import functools

import jax
import jax.numpy as jnp
from jax.experimental import pallas as pl
from jax.experimental.pallas import tpu as pltpu


def _round_up(x, m):
    return ((x + m - 1) // m) * m


def _embedding2d_kernel(cont_ref, idx_ref, cont_w_ref, cat_tab_ref, o_ref, *,
                        n_cont, n_cat, d):
    """One batch tile.  o_ref is a lane-dense 2D (tile_b, (C+K)*D) slab."""
    tm = cont_ref.shape[0]

    # --- continuous features: out[:, i*D:(i+1)*D] = cont[:, i] * W_cont[i, :]
    cont = cont_ref[...].astype(jnp.float32)              # (tm, C)
    w = cont_w_ref[...].astype(jnp.float32)                # (C, D)
    for i in range(n_cont):                                # C is small & static
        o_ref[:, i * d:(i + 1) * d] = (
            cont[:, i:i + 1] * w[i:i + 1, :]).astype(o_ref.dtype)

    # --- categorical features: row gather via one-hot matmul (MXU, f32 acc) --
    tab = cat_tab_ref[...].astype(jnp.float32)             # (R_pad, D)
    idx = idx_ref[...]                                      # (tm, K), offsets pre-added
    r_pad = tab.shape[0]
    iota = jax.lax.broadcasted_iota(jnp.int32, (tm, r_pad), 1)   # hoisted once
    for j in range(n_cat):                                  # K is small & static
        onehot = (idx[:, j:j + 1] == iota).astype(jnp.float32)   # (tm, R_pad)
        rows = jnp.dot(onehot, tab, preferred_element_type=jnp.float32)
        col = (n_cont + j) * d
        o_ref[:, col:col + d] = rows.astype(o_ref.dtype)    # lane-dense store


def embedding2d_forward(continuous, categorical, cont_weight, cat_weights, *,
                        tile_b=512):
    """out = Embedding2dLayer(...).forward({'continuous': ..., 'categorical': ...})."""
    B, C = continuous.shape
    K = categorical.shape[1]
    Cw, D = cont_weight.shape
    assert Cw == C and len(cat_weights) == K and C > 0 and K > 0

    # Concatenate per-column embedding tables into one (R_pad, D) table and
    # shift each column's indices by its row offset (sublane-align rows to x8).
    offsets, acc = [], 0
    for wgt in cat_weights:
        offsets.append(acc)
        acc += int(wgt.shape[0])
    cat_tab = jnp.concatenate(cat_weights, axis=0)                 # (R, D)
    r = cat_tab.shape[0]
    r_pad = _round_up(r, 8)
    if r_pad != r:
        cat_tab = jnp.pad(cat_tab, ((0, r_pad - r), (0, 0)))
    flat_idx = (categorical.astype(jnp.int32)
                + jnp.asarray(offsets, jnp.int32)[None, :])        # (B, K)

    # Batch tiling: big tiles amortize per-grid-step overhead, but keep >= 2
    # grid steps when possible (v7x megacore).  Tail handled by zero-padding.
    tile_b = max(8, min(int(tile_b), _round_up(pl.cdiv(B, 2), 8)))
    n_tiles = pl.cdiv(B, tile_b)
    b_pad = n_tiles * tile_b
    if b_pad != B:
        continuous = jnp.pad(continuous, ((0, b_pad - B), (0, 0)))
        flat_idx = jnp.pad(flat_idx, ((0, b_pad - B), (0, 0)))     # row 0 is valid

    f = C + K
    out_cols = f * D

    # VMEM budget: double-buffered I/O tiles + single-buffered tables + slack.
    est = 4 * (2 * tile_b * (out_cols + C + K)
               + (C + r_pad) * D
               + 4 * tile_b * D
               + 2 * tile_b * r_pad)
    vmem_limit = int(min(max(est, 32 * 1024 * 1024), 64 * 1024 * 1024))

    kernel = functools.partial(_embedding2d_kernel, n_cont=C, n_cat=K, d=D)
    out2d = pl.pallas_call(
        kernel,
        out_shape=jax.ShapeDtypeStruct((b_pad, out_cols), continuous.dtype),
        grid_spec=pl.GridSpec(
            grid=(n_tiles,),
            in_specs=[
                pl.BlockSpec((tile_b, C), lambda b: (b, 0)),       # continuous tile
                pl.BlockSpec((tile_b, K), lambda b: (b, 0)),       # offset indices tile
                pl.BlockSpec((C, D), lambda b: (0, 0),
                             pipeline_mode=pl.Buffered(1)),        # resident cont table
                pl.BlockSpec((r_pad, D), lambda b: (0, 0),
                             pipeline_mode=pl.Buffered(1)),        # resident cat table
            ],
            out_specs=pl.BlockSpec((tile_b, out_cols), lambda b: (b, 0)),
        ),
        compiler_params=pltpu.CompilerParams(
            dimension_semantics=("parallel",),
            vmem_limit_bytes=vmem_limit,
        ),
    )(continuous, flat_idx, cont_weight, cat_tab)

    # Lane-dense 2D kernel layout -> (B, C+K, D) view for the caller (free).
    return out2d[:B].reshape(B, f, D)


if __name__ == "__main__":
    key = jax.random.PRNGKey(0)
    k_cont, k_cat, k_cw, k_tab = jax.random.split(key, 4)

    batch = 16
    continuous_dim = 4
    categorical_cardinality = [5, 7, 3]
    embedding_dim = 128  # lane-dense (multiple of 128)

    continuous = jax.random.normal(k_cont, (batch, continuous_dim), dtype=jnp.float32)
    categorical = jnp.stack(
        [jax.random.randint(jax.random.fold_in(k_cat, i), (batch,), 0, c)
         for i, c in enumerate(categorical_cardinality)], axis=1)

    scale = 1.0 / embedding_dim ** 0.5
    cont_weight = jax.random.normal(
        k_cw, (continuous_dim, embedding_dim), dtype=jnp.float32) * scale
    cat_weights = [
        jax.random.normal(jax.random.fold_in(k_tab, i), (c, embedding_dim),
                          dtype=jnp.float32) * scale
        for i, c in enumerate(categorical_cardinality)
    ]

    out = embedding2d_forward(continuous, categorical, cont_weight, cat_weights)
    jax.block_until_ready(out)

    # Reference: Embedding2dLayer.forward with default config
    ref_cont = continuous[:, :, None] * cont_weight[None, :, :]            # (B, C, D)
    ref_cat = jnp.stack(
        [cat_weights[j][categorical[:, j]] for j in range(len(cat_weights))],
        axis=1)                                                             # (B, K, D)
    ref = jnp.concatenate([ref_cont, ref_cat], axis=1)                      # (B, C+K, D)

    assert out.shape == ref.shape
    assert jnp.allclose(out, ref, atol=1e-5, rtol=1e-5), "mismatch vs reference"
    print("KERNEL_OK")
</pallas_src>

<mosaic_0001>
module attributes {stable_mosaic.version = 11 : i64} {
  func.func @_embedding2d_kernel(%arg0: i32, %arg1: memref<8x4xf32, #tpu.memory_space<vmem>>, %arg2: memref<8x3xi32, #tpu.memory_space<vmem>>, %arg3: memref<4x128xf32, #tpu.memory_space<vmem>>, %arg4: memref<16x128xf32, #tpu.memory_space<vmem>>, %arg5: memref<8x896xf32, #tpu.memory_space<vmem>>) attributes {dimension_semantics = [#tpu.dimension_semantics<parallel>], iteration_bounds = array<i64: 2>, scalar_prefetch = 0 : i64, scratch_operands = 0 : i64, tpu.core_type = #tpu.core_type<tc>, window_params = [{transform_indices = @transform_0, window_bounds = array<i64: 8, 4>}, {transform_indices = @transform_1, window_bounds = array<i64: 8, 3>}, {pipeline_mode = #tpu.pipeline_mode<synchronous>, transform_indices = @transform_2, window_bounds = array<i64: 4, 128>}, {pipeline_mode = #tpu.pipeline_mode<synchronous>, transform_indices = @transform_3, window_bounds = array<i64: 16, 128>}, {transform_indices = @transform_4, window_bounds = array<i64: 8, 896>}]} {
    %c0 = arith.constant 0 : index
    %c0_0 = arith.constant 0 : index
    %0 = vector.load %arg1[%c0, %c0_0] : memref<8x4xf32, #tpu.memory_space<vmem>>, vector<8x4xf32>
    %c0_1 = arith.constant 0 : index
    %c0_2 = arith.constant 0 : index
    %1 = vector.load %arg3[%c0_1, %c0_2] : memref<4x128xf32, #tpu.memory_space<vmem>>, vector<4x128xf32>
    %2 = vector.extract_strided_slice %0 {offsets = [0, 0], sizes = [8, 1], strides = [1, 1]} : vector<8x4xf32> to vector<8x1xf32>
    %3 = vector.extract_strided_slice %1 {offsets = [0, 0], sizes = [1, 128], strides = [1, 1]} : vector<4x128xf32> to vector<1x128xf32>
    %4 = vector.broadcast %2 : vector<8x1xf32> to vector<8x128xf32>
    %5 = vector.broadcast %3 : vector<1x128xf32> to vector<8x128xf32>
    %6 = arith.mulf %4, %5 : vector<8x128xf32>
    %c0_3 = arith.constant 0 : index
    %c0_4 = arith.constant 0 : index
    %7 = vector.load %arg5[%c0_3, %c0_4] : memref<8x896xf32, #tpu.memory_space<vmem>>, vector<8x128xf32>
    tpu.vector_store %arg5[%c0_3, %c0_4], %6 {strides = array<i32>} : memref<8x896xf32, #tpu.memory_space<vmem>>, vector<8x128xf32>,
    %8 = vector.extract_strided_slice %0 {offsets = [0, 1], sizes = [8, 1], strides = [1, 1]} : vector<8x4xf32> to vector<8x1xf32>
    %9 = vector.extract_strided_slice %1 {offsets = [1, 0], sizes = [1, 128], strides = [1, 1]} : vector<4x128xf32> to vector<1x128xf32>
    %10 = vector.broadcast %8 : vector<8x1xf32> to vector<8x128xf32>
    %11 = vector.broadcast %9 : vector<1x128xf32> to vector<8x128xf32>
    %12 = arith.mulf %10, %11 : vector<8x128xf32>
    %c0_5 = arith.constant 0 : index
    %c128 = arith.constant 128 : index
    %13 = vector.load %arg5[%c0_5, %c128] : memref<8x896xf32, #tpu.memory_space<vmem>>, vector<8x128xf32>
    tpu.vector_store %arg5[%c0_5, %c128], %12 {strides = array<i32>} : memref<8x896xf32, #tpu.memory_space<vmem>>, vector<8x128xf32>,
    %14 = vector.extract_strided_slice %0 {offsets = [0, 2], sizes = [8, 1], strides = [1, 1]} : vector<8x4xf32> to vector<8x1xf32>
    %15 = vector.extract_strided_slice %1 {offsets = [2, 0], sizes = [1, 128], strides = [1, 1]} : vector<4x128xf32> to vector<1x128xf32>
    %16 = vector.broadcast %14 : vector<8x1xf32> to vector<8x128xf32>
    %17 = vector.broadcast %15 : vector<1x128xf32> to vector<8x128xf32>
    %18 = arith.mulf %16, %17 : vector<8x128xf32>
    %c0_6 = arith.constant 0 : index
    %c256 = arith.constant 256 : index
    %19 = vector.load %arg5[%c0_6, %c256] : memref<8x896xf32, #tpu.memory_space<vmem>>, vector<8x128xf32>
    tpu.vector_store %arg5[%c0_6, %c256], %18 {strides = array<i32>} : memref<8x896xf32, #tpu.memory_space<vmem>>, vector<8x128xf32>,
    %20 = vector.extract_strided_slice %0 {offsets = [0, 3], sizes = [8, 1], strides = [1, 1]} : vector<8x4xf32> to vector<8x1xf32>
    %21 = vector.extract_strided_slice %1 {offsets = [3, 0], sizes = [1, 128], strides = [1, 1]} : vector<4x128xf32> to vector<1x128xf32>
    %22 = vector.broadcast %20 : vector<8x1xf32> to vector<8x128xf32>
    %23 = vector.broadcast %21 : vector<1x128xf32> to vector<8x128xf32>
    %24 = arith.mulf %22, %23 : vector<8x128xf32>
    %c0_7 = arith.constant 0 : index
    %c384 = arith.constant 384 : index
    %25 = vector.load %arg5[%c0_7, %c384] : memref<8x896xf32, #tpu.memory_space<vmem>>, vector<8x128xf32>
    tpu.vector_store %arg5[%c0_7, %c384], %24 {strides = array<i32>} : memref<8x896xf32, #tpu.memory_space<vmem>>, vector<8x128xf32>,
    %c0_8 = arith.constant 0 : index
    %c0_9 = arith.constant 0 : index
    %26 = vector.load %arg4[%c0_8, %c0_9] : memref<16x128xf32, #tpu.memory_space<vmem>>, vector<16x128xf32>
    %c0_10 = arith.constant 0 : index
    %c0_11 = arith.constant 0 : index
    %27 = vector.load %arg2[%c0_10, %c0_11] : memref<8x3xi32, #tpu.memory_space<vmem>>, vector<8x3xi32>
    %28 = tpu.iota {dimensions = array<i32: 1>} : vector<8x16xi32>
    %29 = vector.extract_strided_slice %27 {offsets = [0, 0], sizes = [8, 1], strides = [1, 1]} : vector<8x3xi32> to vector<8x1xi32>
    %30 = vector.broadcast %29 : vector<8x1xi32> to vector<8x16xi32>
    %31 = arith.cmpi eq, %30, %28 : vector<8x16xi32>
    %32 = arith.extui %31 : vector<8x16xi1> to vector<8x16xi32>
    %33 = arith.sitofp %32 : vector<8x16xi32> to vector<8x16xf32>
    %cst = arith.constant dense<0.000000e+00> : vector<8x128xf32>
    %34 = tpu.matmul %33, %26, %cst {dimension_numbers = #tpu.dot_dimension_numbers<[1], [0], [0], [1], [0, 0, 1, 1], [], []>} : vector<8x16xf32>, vector<16x128xf32>, vector<8x128xf32> -> vector<8x128xf32>
    %c0_12 = arith.constant 0 : index
    %c512 = arith.constant 512 : index
    %35 = vector.load %arg5[%c0_12, %c512] : memref<8x896xf32, #tpu.memory_space<vmem>>, vector<8x128xf32>
    tpu.vector_store %arg5[%c0_12, %c512], %34 {strides = array<i32>} : memref<8x896xf32, #tpu.memory_space<vmem>>, vector<8x128xf32>,
    %36 = vector.extract_strided_slice %27 {offsets = [0, 1], sizes = [8, 1], strides = [1, 1]} : vector<8x3xi32> to vector<8x1xi32>
    %37 = vector.broadcast %36 : vector<8x1xi32> to vector<8x16xi32>
    %38 = arith.cmpi eq, %37, %28 : vector<8x16xi32>
    %39 = arith.extui %38 : vector<8x16xi1> to vector<8x16xi32>
    %40 = arith.sitofp %39 : vector<8x16xi32> to vector<8x16xf32>
    %cst_13 = arith.constant dense<0.000000e+00> : vector<8x128xf32>
    %41 = tpu.matmul %40, %26, %cst_13 {dimension_numbers = #tpu.dot_dimension_numbers<[1], [0], [0], [1], [0, 0, 1, 1], [], []>} : vector<8x16xf32>, vector<16x128xf32>, vector<8x128xf32> -> vector<8x128xf32>
    %c0_14 = arith.constant 0 : index
    %c640 = arith.constant 640 : index
    %42 = vector.load %arg5[%c0_14, %c640] : memref<8x896xf32, #tpu.memory_space<vmem>>, vector<8x128xf32>
    tpu.vector_store %arg5[%c0_14, %c640], %41 {strides = array<i32>} : memref<8x896xf32, #tpu.memory_space<vmem>>, vector<8x128xf32>,
    %43 = vector.extract_strided_slice %27 {offsets = [0, 2], sizes = [8, 1], strides = [1, 1]} : vector<8x3xi32> to vector<8x1xi32>
    %44 = vector.broadcast %43 : vector<8x1xi32> to vector<8x16xi32>
    %45 = arith.cmpi eq, %44, %28 : vector<8x16xi32>
    %46 = arith.extui %45 : vector<8x16xi1> to vector<8x16xi32>
    %47 = arith.sitofp %46 : vector<8x16xi32> to vector<8x16xf32>
    %cst_15 = arith.constant dense<0.000000e+00> : vector<8x128xf32>
    %48 = tpu.matmul %47, %26, %cst_15 {dimension_numbers = #tpu.dot_dimension_numbers<[1], [0], [0], [1], [0, 0, 1, 1], [], []>} : vector<8x16xf32>, vector<16x128xf32>, vector<8x128xf32> -> vector<8x128xf32>
    %c0_16 = arith.constant 0 : index
    %c768 = arith.constant 768 : index
    %49 = vector.load %arg5[%c0_16, %c768] : memref<8x896xf32, #tpu.memory_space<vmem>>, vector<8x128xf32>
    tpu.vector_store %arg5[%c0_16, %c768], %48 {strides = array<i32>} : memref<8x896xf32, #tpu.memory_space<vmem>>, vector<8x128xf32>,
    return
  }
  func.func @transform_0(%arg0: i32) -> (i32, i32) {
    %c0_i32 = arith.constant 0 : i32
    %c0_i32_0 = arith.constant 0 : i32
    return %arg0, %c0_i32 : i32, i32
  }
  func.func @transform_1(%arg0: i32) -> (i32, i32) {
    %c0_i32 = arith.constant 0 : i32
    %c0_i32_0 = arith.constant 0 : i32
    return %arg0, %c0_i32 : i32, i32
  }
  func.func @transform_2(%arg0: i32) -> (i32, i32) {
    %c0_i32 = arith.constant 0 : i32
    %c0_i32_0 = arith.constant 0 : i32
    %c0_i32_1 = arith.constant 0 : i32
    return %c0_i32, %c0_i32_0 : i32, i32
  }
  func.func @transform_3(%arg0: i32) -> (i32, i32) {
    %c0_i32 = arith.constant 0 : i32
    %c0_i32_0 = arith.constant 0 : i32
    %c0_i32_1 = arith.constant 0 : i32
    return %c0_i32, %c0_i32_0 : i32, i32
  }
  func.func @transform_4(%arg0: i32) -> (i32, i32) {
    %c0_i32 = arith.constant 0 : i32
    %c0_i32_0 = arith.constant 0 : i32
    return %arg0, %c0_i32 : i32, i32
  }
}

</mosaic_0001>

<llo_original>
// kernel: tpu_custom_call.1
$region0: #{tpu_custom_call.1}
  #allocation0 [shape = 'u32[]', space=smem, size = 0x4, offset = 0x4, fixed_abs, tag = 'smem constant byte address 0x4 - core index']
  #allocation1 [shape = 'u32[144,128]{1,0:T(1,128)}', space=vmem, size = 0x12000, scoped, tag = 'internal scratch']
  %s0 = inlined_call_operand.vmem [shape: f32[16,4], index: 0, kind: input, shape index: {}]
  %s1 = inlined_call_operand.vmem [shape: s32[16,3], index: 1, kind: input, shape index: {}]
  %s2 = inlined_call_operand.vmem [shape: f32[4,128], index: 2, kind: input, shape index: {}]
  %s3 = inlined_call_operand.vmem [shape: f32[16,128], index: 3, kind: input, shape index: {}]
  %s4 = inlined_call_operand.hbm [shape: f32[16,896], index: 4, kind: output, shape index: {}]
  %s5 = sld [smem:[#allocation0]]
  $region49: #{tpu_custom_call.1} parent=0
    _
  %s7 = ssub.s32 1, %s5
  %s8 = scalar_select 0, %s7, %s5
  $region1: #{tpu_custom_call.1} parent=0
    #allocation2 [shape = 'u8[57344]{0}', space=vmem, size = 0xe000, scoped, tag = 'output window, operand 0']
    #allocation3 [shape = 's32[2]{0}', space=sflag, size = 0x8, scoped, tag = 'scoped memory for tpu_custom_call.1']
    %9 = vsyncpa [#allocation3], 0
    %s10 = scalar_lea.sflag [#allocation3], 1
    %11 = vsyncpa %s10, 0
    loop: start=0, step=1, limit=4
    $region2: #{tpu_custom_call.1} parent=1 // loop_pre_header
      _
    $region3: #{tpu_custom_call.1} parent=1 // loop_header
      %s13 = sphi 0, %s17
      %p14 = scmp.ge.s32.totalorder %s13, 4
      %s23 = sphi 0, %s25
      %s26 = sphi 0, %s23
      %s27 = sphi 0, %s26
      %s43 = sphi 0, %s27
      %s49 = sphi 0, %s51
      %s52 = sphi 0, %s49
      %s53 = sphi 0, %s52
      %s69 = sphi 0, %s53
      %s73 = sphi 0, %s73
      %s75 = sphi 0, %s73
      %s76 = sphi 0, %s75
      %s90 = sphi 0, %s76
      %s94 = sphi 0, %s94
      %s96 = sphi 0, %s94
      %s97 = sphi 0, %s96
      %s111 = sphi 0, %s97
      %s117 = sphi 0, %s119
      %s120 = sphi 0, %s117
      %s121 = sphi 0, %s120
      %s137 = sphi 0, %s121
    $region4: #{tpu_custom_call.1} parent=1 // loop_header_branch
      %16 = sbr.rel (%p14) target = $region8
    $region5: #{tpu_custom_call.1} parent=1 // loop_body
      %s18 = ssub.s32 %s13, 1
      %s19 = ssub.s32 %s13, 2
      %s20 = sadd.s32 %s13, 1
      %s21 = ssub.s32 %s13, %s20
      %p22 = scmp.eq.s32.totalorder %s21, 0
      %s24 = sadd.s32 %s23, 1
      %s25 = scalar_select %p22, %s23, %s24
      %p28 = pneg %p22
      %p29 = scmp.eq.s32.totalorder %s13, 1
      %p30 = por %p28, %p29
      %p31 = scmp.ne.s32.totalorder %s23, %s26
      %p32 = scmp.eq.s32.totalorder %s13, 0
      %p33 = por %p31, %p32
      %p34 = scmp.ne.s32.totalorder %s23, %s26
      %p35 = scmp.eq.s32.totalorder %s18, 1
      %p36 = por %p34, %p35
      %p37 = scmp.ne.s32.totalorder %s26, %s27
      %p38 = scmp.eq.s32.totalorder %s18, 0
      %p39 = por %p37, %p38
      %p40 = scmp.ne.s32.totalorder %s26, %s27
      %p41 = scmp.eq.s32.totalorder %s19, 1
      %p42 = por %p40, %p41
      %p44 = scmp.ne.s32.totalorder %s27, %s43
      %p45 = scmp.eq.s32.totalorder %s19, 0
      %p46 = por %p44, %p45
      %s47 = ssub.s32 %s13, %s20
      %p48 = scmp.eq.s32.totalorder %s47, 0
      %s50 = sadd.s32 %s49, 1
      %s51 = scalar_select %p48, %s49, %s50
      %p54 = pneg %p48
      %p55 = scmp.eq.s32.totalorder %s13, 1
      %p56 = por %p54, %p55
      %p57 = scmp.ne.s32.totalorder %s49, %s52
      %p58 = scmp.eq.s32.totalorder %s13, 0
      %p59 = por %p57, %p58
      %p60 = scmp.ne.s32.totalorder %s49, %s52
      %p61 = scmp.eq.s32.totalorder %s18, 1
      %p62 = por %p60, %p61
      %p63 = scmp.ne.s32.totalorder %s52, %s53
      %p64 = scmp.eq.s32.totalorder %s18, 0
      %p65 = por %p63, %p64
      %p66 = scmp.ne.s32.totalorder %s52, %s53
      %p67 = scmp.eq.s32.totalorder %s19, 1
      %p68 = por %p66, %p67
      %p70 = scmp.ne.s32.totalorder %s53, %s69
      %p71 = scmp.eq.s32.totalorder %s19, 0
      %p72 = por %p70, %p71
      %s74 = sadd.s32 %s73, 1
      %p77 = scmp.eq.s32.totalorder %s13, 1
      %p78 = scmp.ne.s32.totalorder %s73, %s75
      %p79 = scmp.eq.s32.totalorder %s13, 0
      %p80 = por %p78, %p79
      %p81 = scmp.ne.s32.totalorder %s73, %s75
      %p82 = scmp.eq.s32.totalorder %s18, 1
      %p83 = por %p81, %p82
      %p84 = scmp.ne.s32.totalorder %s75, %s76
      %p85 = scmp.eq.s32.totalorder %s18, 0
      %p86 = por %p84, %p85
      %p87 = scmp.ne.s32.totalorder %s75, %s76
      %p88 = scmp.eq.s32.totalorder %s19, 1
      %p89 = por %p87, %p88
      %p91 = scmp.ne.s32.totalorder %s76, %s90
      %p92 = scmp.eq.s32.totalorder %s19, 0
      %p93 = por %p91, %p92
      %s95 = sadd.s32 %s94, 1
      %p98 = scmp.eq.s32.totalorder %s13, 1
      %p99 = scmp.ne.s32.totalorder %s94, %s96
      %p100 = scmp.eq.s32.totalorder %s13, 0
      %p101 = por %p99, %p100
      %p102 = scmp.ne.s32.totalorder %s94, %s96
      %p103 = scmp.eq.s32.totalorder %s18, 1
      %p104 = por %p102, %p103
      %p105 = scmp.ne.s32.totalorder %s96, %s97
      %p106 = scmp.eq.s32.totalorder %s18, 0
      %p107 = por %p105, %p106
      %p108 = scmp.ne.s32.totalorder %s96, %s97
      %p109 = scmp.eq.s32.totalorder %s19, 1
      %p110 = por %p108, %p109
      %p112 = scmp.ne.s32.totalorder %s97, %s111
      %p113 = scmp.eq.s32.totalorder %s19, 0
      %p114 = por %p112, %p113
      %s115 = ssub.s32 %s13, %s20
      %p116 = scmp.eq.s32.totalorder %s115, 0
      %s118 = sadd.s32 %s117, 1
      %s119 = scalar_select %p116, %s117, %s118
      %p122 = pneg %p116
      %p123 = scmp.eq.s32.totalorder %s13, 1
      %p124 = por %p122, %p123
      %p125 = scmp.ne.s32.totalorder %s117, %s120
      %p126 = scmp.eq.s32.totalorder %s13, 0
      %p127 = por %p125, %p126
      %p128 = scmp.ne.s32.totalorder %s117, %s120
      %p129 = scmp.eq.s32.totalorder %s18, 1
      %p130 = por %p128, %p129
      %p131 = scmp.ne.s32.totalorder %s120, %s121
      %p132 = scmp.eq.s32.totalorder %s18, 0
      %p133 = por %p131, %p132
      %p134 = scmp.ne.s32.totalorder %s120, %s121
      %p135 = scmp.eq.s32.totalorder %s19, 1
      %p136 = por %p134, %p135
      %p138 = scmp.ne.s32.totalorder %s121, %s137
      %p139 = scmp.eq.s32.totalorder %s19, 0
      %p140 = por %p138, %p139
      %p141 = scmp.le.s32.totalorder 1, %s13
      %p142 = scmp.lt.s32.totalorder %s13, 3
      %p143 = pnand %p141, %p142
      %p144 = pneg %p143
      // Predicated region
      $region9: #{tpu_custom_call.1} parent=5 // pred_check
        _
      $region10: #{tpu_custom_call.1} parent=5 // pred_check_branch
        %146 = sbr.rel (%p143) target = $region12
      $region11: #{tpu_custom_call.1} parent=5 // pred_region
        %s147 = ssub.s32 %s13, 1
        // Predicated region
        $region13: #{tpu_custom_call.1} parent=11 // pred_check
          %p148 = pneg %p86
        $region14: #{tpu_custom_call.1} parent=11 // pred_check_branch
          %150 = sbr.rel (%p148) target = $region16
        $region15: #{tpu_custom_call.1} parent=11 // pred_region
          _
        $region16: #{tpu_custom_call.1} parent=11 // pred_fallthru
          _
        // Predicated region
        $region17: #{tpu_custom_call.1} parent=11 // pred_check
          %p151 = pneg %p107
        $region18: #{tpu_custom_call.1} parent=11 // pred_check_branch
          %153 = sbr.rel (%p151) target = $region20
        $region19: #{tpu_custom_call.1} parent=11 // pred_region
          _
        $region20: #{tpu_custom_call.1} parent=11 // pred_fallthru
          _
      $region12: #{tpu_custom_call.1} parent=5 // pred_fallthru
        _
      %p154 = scmp.lt.s32.totalorder %s13, 2
      // Predicated region
      $region21: #{tpu_custom_call.1} parent=5 // pred_check
        %p155 = pneg %p154
      $region22: #{tpu_custom_call.1} parent=5 // pred_check_branch
        %157 = sbr.rel (%p155) target = $region24
      $region23: #{tpu_custom_call.1} parent=5 // pred_region
        // Predicated region
        $region25: #{tpu_custom_call.1} parent=23 // pred_check
          %p158 = pneg %p33
        $region26: #{tpu_custom_call.1} parent=23 // pred_check_branch
          %160 = sbr.rel (%p158) target = $region28
        $region27: #{tpu_custom_call.1} parent=23 // pred_region
          %p161 = scmp.lt.s32.totalorder %s13, 1
          %s162 = scalar_select %p161, %s13, 1
          %s163 = smul.addr %s162, 8
          %s164 = scalar_lea.vmem %s0, %s163
        $region28: #{tpu_custom_call.1} parent=23 // pred_fallthru
          _
        // Predicated region
        $region29: #{tpu_custom_call.1} parent=23 // pred_check
          %p165 = pneg %p59
        $region30: #{tpu_custom_call.1} parent=23 // pred_check_branch
          %167 = sbr.rel (%p165) target = $region32
        $region31: #{tpu_custom_call.1} parent=23 // pred_region
          %p168 = scmp.lt.s32.totalorder %s13, 1
          %s169 = scalar_select %p168, %s13, 1
          %s170 = smul.addr %s169, 8
          %s171 = scalar_lea.vmem %s1, %s170
        $region32: #{tpu_custom_call.1} parent=23 // pred_fallthru
          _
      $region24: #{tpu_custom_call.1} parent=5 // pred_fallthru
        _
      %p172 = scmp.le.s32.totalorder 1, %s13
      %p173 = scmp.lt.s32.totalorder %s13, 3
      %p174 = pnand %p172, %p173
      %p175 = pneg %p174
      // Predicated region
      $region33: #{tpu_custom_call.1} parent=5 // pred_check
        _
      $region34: #{tpu_custom_call.1} parent=5 // pred_check_branch
        %177 = sbr.rel (%p174) target = $region36
      $region35: #{tpu_custom_call.1} parent=5 // pred_region
        %s178 = ssub.s32 %s13, 1
        %p179 = scmp.lt.s32.totalorder %s18, 1
        %s180 = scalar_select %p179, %s18, 1
        %s181 = smul.addr %s180, 8
        %s182 = scalar_lea.vmem %s0, %s181
        %p183 = pneg %p39
        %p184 = pneg %p36
        %p185 = scmp.lt.s32.totalorder %s18, 1
        %s186 = scalar_select %p185, %s18, 1
        %s187 = smul.addr %s186, 8
        %s188 = scalar_lea.vmem %s1, %s187
        %p189 = pneg %p65
        %p190 = pneg %p62
        %p191 = pneg %p86
        %p192 = pneg %p83
        %p193 = pneg %p107
        %p194 = pneg %p104
        %p195 = pneg %p133
        %p196 = pneg %p130
        %s197 = sand.u32 %s120, 1
        %s198 = scalar_lea.sflag [#allocation3], %s197
        %s199 = sand.u32 %s120, 1
        %s200 = smul.addr %s199, 56
        %s201 = scalar_lea.vmem [#allocation2], %s200
        %p202 = scmp.lt.s32.totalorder %s18, 1
        %s203 = scalar_select %p202, %s18, 1
        %s204 = smul.addr %s203, 8
        %s205 = scalar_lea.vmem %s0, %s204
        %p206 = scmp.lt.s32.totalorder %s18, 1
        %s207 = scalar_select %p206, %s18, 1
        %s208 = smul.addr %s207, 8
        %s209 = scalar_lea.vmem %s1, %s208
        %v210 = vld [vmem:[%s205] sm:$0xff]
        %v211 = vld [vmem:[%s2] sm:$0xf]
        %213 = vset.pattern.permute.xlu0 0
        %214 = vperm.xlu0 %213, %v210
        %v215 = vpop.permute.xlu0 %214
        %v217 = vlaneseq
        %v218 = vshrl.u32 %v217, 7
        %v219 = vsub.s32 0, %v218
        %v220 = vrot.slane %v211, %v219
        %v221 = vmul.f32 %v215, %v220
        %222 = vst [vmem:[%s201] sm:$0xff] %v221
        %223 = vset.pattern.permute.xlu0 1
        %224 = vperm.xlu0 %223, %v210
        %v225 = vpop.permute.xlu0 %224
        %v227 = vlaneseq
        %v228 = vshrl.u32 %v227, 7
        %v229 = vsub.s32 1, %v228
        %v230 = vrot.slane %v211, %v229
        %v231 = vmul.f32 %v225, %v230
        %232 = vst [vmem:[%s201 + $0x8] sm:$0xff] %v231
        %233 = vset.pattern.permute.xlu0 2
        %234 = vperm.xlu0 %233, %v210
        %v235 = vpop.permute.xlu0 %234
        %v237 = vlaneseq
        %v238 = vshrl.u32 %v237, 7
        %v239 = vsub.s32 2, %v238
        %v240 = vrot.slane %v211, %v239
        %v241 = vmul.f32 %v235, %v240
        %242 = vst [vmem:[%s201 + $0x10] sm:$0xff] %v241
        %243 = vset.pattern.permute.xlu0 3
        %244 = vperm.xlu0 %243, %v210
        %v245 = vpop.permute.xlu0 %244
        %v247 = vlaneseq
        %v248 = vshrl.u32 %v247, 7
        %v249 = vsub.s32 3, %v248
        %v250 = vrot.slane %v211, %v249
        %v251 = vmul.f32 %v245, %v250
        %252 = vst [vmem:[%s201 + $0x18] sm:$0xff] %v251
        %v253 = vld [vmem:[%s3] sm:$0xff]
        %v254 = vld [vmem:[%s3 + $0x8] sm:$0xff]
        %v255 = vld [vmem:[%s209] sm:$0xff]
        %v256 = vlaneseq
        %v257 = vand.u32 %v256, 127
        %258 = vset.pattern.permute.xlu0 0
        %259 = vperm.xlu0 %258, %v255
        %v260 = vpop.permute.xlu0 %259
        %vm261 = vcmp.eq.s32.totalorder %v260, %v257
        %v262 = vsel %vm261, 1, 0
        %v263 = vcvt.s32.f32 %v262
        %vm264 = vcmask 130048
        %v266 = vsel %vm264, %v263, 0
        %268 = vmatprep.subr.mxu0 0.0
        %269 = vmatpush1.msra.mxu0 %v253
        %270 = vmatprep.subr.mxu0 0.0
        %271 = vmatpush1.msra.mxu0 %v254
        %272 = vmatprep.subr.mxu0 0.0
        %273 = vmatpush1.msra.mxu0 0.0
        %274 = vmatprep.subr.mxu0 0.0
        %275 = vmatpush1.msra.mxu0 0.0
        %276 = vmatprep.subr.mxu0 0.0
        %277 = vmatpush1.msra.mxu0 0.0
        %278 = vmatprep.subr.mxu0 0.0
        %279 = vmatpush1.msra.mxu0 0.0
        %280 = vmatprep.subr.mxu0 0.0
        %281 = vmatpush1.msra.mxu0 0.0
        %282 = vmatprep.subr.mxu0 0.0
        %283 = vmatpush1.msra.mxu0 0.0
        %284 = vmatprep.subr.mxu0 0.0
        %285 = vmatpush1.msra.mxu0 0.0
        %286 = vmatprep.subr.mxu0 0.0
        %287 = vmatpush1.msra.mxu0 0.0
        %288 = vmatprep.subr.mxu0 0.0
        %289 = vmatpush1.msra.mxu0 0.0
        %290 = vmatprep.subr.mxu0 0.0
        %291 = vmatpush1.msra.mxu0 0.0
        %292 = vmatprep.subr.mxu0 0.0
        %293 = vmatpush1.msra.mxu0 0.0
        %294 = vmatprep.subr.mxu0 0.0
        %295 = vmatpush1.msra.mxu0 0.0
        %296 = vmatprep.subr.mxu0 0.0
        %297 = vmatpush1.msra.mxu0 0.0
        %298 = vmatprep.subr.mxu0 0.0
        %299 = vmatpush1.msra.mxu0 0.0
        %300 = vmatprep.subr.mxu0 0.0
        %301 = vmatpush1.msra.mxu0 0.0
        %302 = vmatprep.subr.mxu0 0.0
        %303 = vmatpush1.msra.mxu0 0.0
        %304 = vmatprep.subr.mxu0 0.0
        %305 = vmatpush1.msra.mxu0 0.0
        %306 = vmatprep.subr.mxu0 0.0
        %307 = vmatpush1.msra.mxu0 0.0
        %308 = vmatprep.subr.mxu0 0.0
        %309 = vmatpush1.msra.mxu0 0.0
        %310 = vmatprep.subr.mxu0 0.0
        %311 = vmatpush1.msra.mxu0 0.0
        %312 = vmatprep.subr.mxu0 0.0
        %313 = vmatpush1.msra.mxu0 0.0
        %314 = vmatprep.subr.mxu0 0.0
        %315 = vmatpush1.msra.mxu0 0.0
        %316 = vmatprep.subr.mxu0 0.0
        %317 = vmatpush1.msra.mxu0 0.0
        %318 = vmatprep.subr.mxu0 0.0
        %319 = vmatpush1.msra.mxu0 0.0
        %320 = vmatprep.subr.mxu0 0.0
        %321 = vmatpush1.msra.mxu0 0.0
        %322 = vmatprep.subr.mxu0 0.0
        %323 = vmatpush1.msra.mxu0 0.0
        %324 = vmatprep.subr.mxu0 0.0
        %325 = vmatpush1.msra.mxu0 0.0
        %326 = vmatprep.subr.mxu0 0.0
        %327 = vmatpush1.msra.mxu0 0.0
        %328 = vmatprep.subr.mxu0 0.0
        %329 = vmatpush1.msra.mxu0 0.0
        %330 = vmatprep.subr.mxu0 0.0
        %331 = vmatpush1.msra.mxu0 0.0
        %332 = vmatprep.mubr.f32.mxu0 0.0
        %333 = vmatmul.mubr.f32.gmra.mrb[0].mxu0 %v266
        %v334 = vpop.f32.mrb[0].mxu0
        %v335 = vadd.f32 0.0, %v334
        %v336 = vpop.f32.mrb[0].mxu0
        %337 = vdwg.mxu0
        %338 = vst [vmem:[%s201 + $0x20] sm:$0xff] %v335
        %339 = vset.pattern.permute.xlu0 1
        %340 = vperm.xlu0 %339, %v255
        %v341 = vpop.permute.xlu0 %340
        %vm342 = vcmp.eq.s32.totalorder %v341, %v257
        %v343 = vsel %vm342, 1, 0
        %v344 = vcvt.s32.f32 %v343
        %v346 = vsel %vm264, %v344, 0
        %348 = vmatprep.subr.mxu0 0.0
        %349 = vmatpush1.msra.mxu0 %v253
        %350 = vmatprep.subr.mxu0 0.0
        %351 = vmatpush1.msra.mxu0 %v254
        %352 = vmatprep.subr.mxu0 0.0
        %353 = vmatpush1.msra.mxu0 0.0
        %354 = vmatprep.subr.mxu0 0.0
        %355 = vmatpush1.msra.mxu0 0.0
        %356 = vmatprep.subr.mxu0 0.0
        %357 = vmatpush1.msra.mxu0 0.0
        %358 = vmatprep.subr.mxu0 0.0
        %359 = vmatpush1.msra.mxu0 0.0
        %360 = vmatprep.subr.mxu0 0.0
        %361 = vmatpush1.msra.mxu0 0.0
        %362 = vmatprep.subr.mxu0 0.0
        %363 = vmatpush1.msra.mxu0 0.0
        %364 = vmatprep.subr.mxu0 0.0
        %365 = vmatpush1.msra.mxu0 0.0
        %366 = vmatprep.subr.mxu0 0.0
        %367 = vmatpush1.msra.mxu0 0.0
        %368 = vmatprep.subr.mxu0 0.0
        %369 = vmatpush1.msra.mxu0 0.0
        %370 = vmatprep.subr.mxu0 0.0
        %371 = vmatpush1.msra.mxu0 0.0
        %372 = vmatprep.subr.mxu0 0.0
        %373 = vmatpush1.msra.mxu0 0.0
        %374 = vmatprep.subr.mxu0 0.0
        %375 = vmatpush1.msra.mxu0 0.0
        %376 = vmatprep.subr.mxu0 0.0
        %377 = vmatpush1.msra.mxu0 0.0
        %378 = vmatprep.subr.mxu0 0.0
        %379 = vmatpush1.msra.mxu0 0.0
        %380 = vmatprep.subr.mxu0 0.0
        %381 = vmatpush1.msra.mxu0 0.0
        %382 = vmatprep.subr.mxu0 0.0
        %383 = vmatpush1.msra.mxu0 0.0
        %384 = vmatprep.subr.mxu0 0.0
        %385 = vmatpush1.msra.mxu0 0.0
        %386 = vmatprep.subr.mxu0 0.0
        %387 = vmatpush1.msra.mxu0 0.0
        %388 = vmatprep.subr.mxu0 0.0
        %389 = vmatpush1.msra.mxu0 0.0
        %390 = vmatprep.subr.mxu0 0.0
        %391 = vmatpush1.msra.mxu0 0.0
        %392 = vmatprep.subr.mxu0 0.0
        %393 = vmatpush1.msra.mxu0 0.0
        %394 = vmatprep.subr.mxu0 0.0
        %395 = vmatpush1.msra.mxu0 0.0
        %396 = vmatprep.subr.mxu0 0.0
        %397 = vmatpush1.msra.mxu0 0.0
        %398 = vmatprep.subr.mxu0 0.0
        %399 = vmatpush1.msra.mxu0 0.0
        %400 = vmatprep.subr.mxu0 0.0
        %401 = vmatpush1.msra.mxu0 0.0
        %402 = vmatprep.subr.mxu0 0.0
        %403 = vmatpush1.msra.mxu0 0.0
        %404 = vmatprep.subr.mxu0 0.0
        %405 = vmatpush1.msra.mxu0 0.0
        %406 = vmatprep.subr.mxu0 0.0
        %407 = vmatpush1.msra.mxu0 0.0
        %408 = vmatprep.subr.mxu0 0.0
        %409 = vmatpush1.msra.mxu0 0.0
        %410 = vmatprep.subr.mxu0 0.0
        %411 = vmatpush1.msra.mxu0 0.0
        %412 = vmatprep.mubr.f32.mxu0 0.0
        %413 = vmatmul.mubr.f32.gmra.mrb[0].mxu0 %v346
        %v414 = vpop.f32.mrb[0].mxu0
        %v415 = vadd.f32 0.0, %v414
        %v416 = vpop.f32.mrb[0].mxu0
        %417 = vdwg.mxu0
        %418 = vst [vmem:[%s201 + $0x28] sm:$0xff] %v415
        %419 = vset.pattern.permute.xlu0 2
        %420 = vperm.xlu0 %419, %v255
        %v421 = vpop.permute.xlu0 %420
        %vm422 = vcmp.eq.s32.totalorder %v421, %v257
        %v423 = vsel %vm422, 1, 0
        %v424 = vcvt.s32.f32 %v423
        %v426 = vsel %vm264, %v424, 0
        %428 = vmatprep.subr.mxu0 0.0
        %429 = vmatpush1.msra.mxu0 %v253
        %430 = vmatprep.subr.mxu0 0.0
        %431 = vmatpush1.msra.mxu0 %v254
        %432 = vmatprep.subr.mxu0 0.0
        %433 = vmatpush1.msra.mxu0 0.0
        %434 = vmatprep.subr.mxu0 0.0
        %435 = vmatpush1.msra.mxu0 0.0
        %436 = vmatprep.subr.mxu0 0.0
        %437 = vmatpush1.msra.mxu0 0.0
        %438 = vmatprep.subr.mxu0 0.0
        %439 = vmatpush1.msra.mxu0 0.0
        %440 = vmatprep.subr.mxu0 0.0
        %441 = vmatpush1.msra.mxu0 0.0
        %442 = vmatprep.subr.mxu0 0.0
        %443 = vmatpush1.msra.mxu0 0.0
        %444 = vmatprep.subr.mxu0 0.0
        %445 = vmatpush1.msra.mxu0 0.0
        %446 = vmatprep.subr.mxu0 0.0
        %447 = vmatpush1.msra.mxu0 0.0
        %448 = vmatprep.subr.mxu0 0.0
        %449 = vmatpush1.msra.mxu0 0.0
        %450 = vmatprep.subr.mxu0 0.0
        %451 = vmatpush1.msra.mxu0 0.0
        %452 = vmatprep.subr.mxu0 0.0
        %453 = vmatpush1.msra.mxu0 0.0
        %454 = vmatprep.subr.mxu0 0.0
        %455 = vmatpush1.msra.mxu0 0.0
        %456 = vmatprep.subr.mxu0 0.0
        %457 = vmatpush1.msra.mxu0 0.0
        %458 = vmatprep.subr.mxu0 0.0
        %459 = vmatpush1.msra.mxu0 0.0
        %460 = vmatprep.subr.mxu0 0.0
        %461 = vmatpush1.msra.mxu0 0.0
        %462 = vmatprep.subr.mxu0 0.0
        %463 = vmatpush1.msra.mxu0 0.0
        %464 = vmatprep.subr.mxu0 0.0
        %465 = vmatpush1.msra.mxu0 0.0
        %466 = vmatprep.subr.mxu0 0.0
        %467 = vmatpush1.msra.mxu0 0.0
        %468 = vmatprep.subr.mxu0 0.0
        %469 = vmatpush1.msra.mxu0 0.0
        %470 = vmatprep.subr.mxu0 0.0
        %471 = vmatpush1.msra.mxu0 0.0
        %472 = vmatprep.subr.mxu0 0.0
        %473 = vmatpush1.msra.mxu0 0.0
        %474 = vmatprep.subr.mxu0 0.0
        %475 = vmatpush1.msra.mxu0 0.0
        %476 = vmatprep.subr.mxu0 0.0
        %477 = vmatpush1.msra.mxu0 0.0
        %478 = vmatprep.subr.mxu0 0.0
        %479 = vmatpush1.msra.mxu0 0.0
        %480 = vmatprep.subr.mxu0 0.0
        %481 = vmatpush1.msra.mxu0 0.0
        %482 = vmatprep.subr.mxu0 0.0
        %483 = vmatpush1.msra.mxu0 0.0
        %484 = vmatprep.subr.mxu0 0.0
        %485 = vmatpush1.msra.mxu0 0.0
        %486 = vmatprep.subr.mxu0 0.0
        %487 = vmatpush1.msra.mxu0 0.0
        %488 = vmatprep.subr.mxu0 0.0
        %489 = vmatpush1.msra.mxu0 0.0
        %490 = vmatprep.subr.mxu0 0.0
        %491 = vmatpush1.msra.mxu0 0.0
        %492 = vmatprep.mubr.f32.mxu0 0.0
        %493 = vmatmul.mubr.f32.gmra.mrb[0].mxu0 %v426
        %v494 = vpop.f32.mrb[0].mxu0
        %v495 = vadd.f32 0.0, %v494
        %v496 = vpop.f32.mrb[0].mxu0
        %497 = vdwg.mxu0
        %498 = vst [vmem:[%s201 + $0x30] sm:$0xff] %v495
        %s499 = sand.u32 %s120, 1
        %s500 = scalar_lea.sflag [#allocation3], %s499
        %s501 = sand.u32 %s120, 1
        %s502 = smul.addr %s501, 56
        %s503 = scalar_lea.vmem [#allocation2], %s502
        // Predicated region
        $region37: #{tpu_custom_call.1} parent=35 // pred_check
          %p504 = pneg %p130
        $region38: #{tpu_custom_call.1} parent=35 // pred_check_branch
          %506 = sbr.rel (%p504) target = $region40
        $region39: #{tpu_custom_call.1} parent=35 // pred_region
          %s508 = ssub.s32 896, 896
          %509 = vsyncadd %s500, %s508
          %s510 = smul.addr %s18, 7
          %s511 = smul.addr %s510, 128
          %s512 = scalar_lea.hbm %s4, %s511
          %s514 = sshll.u32 %s503, 4
          %s515 = int_to_ptr.vmem [resolvable:$true] %s514
          %517 = dma.vmem_to_hbm [thread:$0]  %s515, 896, %s512, %s500
        $region40: #{tpu_custom_call.1} parent=35 // pred_fallthru
          _
      $region36: #{tpu_custom_call.1} parent=5 // pred_fallthru
        _
      %p518 = scmp.le.s32.totalorder 2, %s13
      // Predicated region
      $region41: #{tpu_custom_call.1} parent=5 // pred_check
        %p519 = pneg %p518
      $region42: #{tpu_custom_call.1} parent=5 // pred_check_branch
        %521 = sbr.rel (%p519) target = $region44
      $region43: #{tpu_custom_call.1} parent=5 // pred_region
        %s522 = ssub.s32 %s13, 2
        // Predicated region
        $region45: #{tpu_custom_call.1} parent=43 // pred_check
          %p523 = pneg %p136
        $region46: #{tpu_custom_call.1} parent=43 // pred_check_branch
          %525 = sbr.rel (%p523) target = $region48
        $region47: #{tpu_custom_call.1} parent=43 // pred_region
          %s526 = sand.u32 %s121, 1
          %s527 = scalar_lea.sflag [#allocation3], %s526
          %s528 = sand.u32 %s121, 1
          %s529 = smul.addr %s528, 56
          %s530 = scalar_lea.vmem [#allocation2], %s529
          %531 = dma.done %s527, 896
        $region48: #{tpu_custom_call.1} parent=43 // pred_fallthru
          _
      $region44: #{tpu_custom_call.1} parent=5 // pred_fallthru
        _
    $region6: #{tpu_custom_call.1} parent=1 // loop_footer
      %s17 = sadd.s32 1, %s13
    $region7: #{tpu_custom_call.1} parent=1 // loop_footer_branch
      %12 = sbr.rel target = $region3
    $region8: #{tpu_custom_call.1} parent=1 // loop_exit
      _
    %532 = vsyncpa [#allocation3], 1
    %s533 = scalar_lea.sflag [#allocation3], 1
    %534 = vsyncpa %s533, 1

</llo_original>
